<compile_context>
chip_gen: v5e
topology: v5e:2x2
jax: 0.10.0
libtpu: 0.0.40
codegen_flags: <defaults>
</compile_context>

<pallas_src>
import math

import jax
import jax.numpy as jnp
from jax.experimental import pallas as pl
from jax.experimental.pallas import tpu as pltpu

LANE = 128


def _round_up(x, m):
    return ((x + m - 1) // m) * m


def _choose_tiles(n, max_tile=512):
    """Pick (tm, tk, n_pad): large tiles, bounded padding waste, >=2 row blocks."""
    n128 = _round_up(max(n, 1), LANE)
    tk = LANE
    for t in (256, 512):
        # accept a larger tile only if it keeps padding overhead under ~25%
        if t <= max_tile and _round_up(n128, t) <= max(n128, int(1.25 * n128)):
            tk = t
    n_pad = _round_up(n128, tk)
    tm = tk
    # Keep at least 2 row blocks when the graph allows it, so v7x's second
    # TensorCore gets work (harmless on single-TC v5e/v6e).
    if n_pad // tm < 2 and tm > LANE:
        tm //= 2
    return tm, tk, n_pad


def prepare_gcn_graph(hat_d, adjacency, *, max_tile=512):
    """One-time per-graph prep (the graph is static across layers / steps):
    pick tile sizes, pad the adjacency to lane-dense bf16 tiles (0/1 adjacency
    is exact in bf16) and pad hat_d to f32. Cache the result across calls so
    the steady-state HBM cost of A is just the kernel's own read."""
    n = adjacency.shape[0]
    tm, tk, n_pad = _choose_tiles(n, max_tile)
    a_p = jnp.zeros((n_pad, n_pad), jnp.bfloat16).at[:n, :n].set(
        adjacency.astype(jnp.bfloat16))
    d_p = jnp.zeros((n_pad, 1), jnp.float32).at[:n, 0].set(
        hat_d.astype(jnp.float32))
    return dict(a_p=a_p, d_p=d_p, n=n, n_pad=n_pad, tm=tm, tk=tk)


def _project_kernel(d_ref, x_ref, w_ref, y_ref):
    """Y = (d ⊙ X) @ W^T for one row block (d-scaling done exactly once)."""
    xs = (d_ref[...] * x_ref[...].astype(jnp.float32)).astype(jnp.bfloat16)
    y_ref[...] = jnp.dot(xs, w_ref[...],
                         preferred_element_type=jnp.float32).astype(y_ref.dtype)


def _aggregate_kernel(d_ref, a_ref, y_ref, b_ref, out_ref):
    """out_i = d_i ⊙ (Σ_k A_ik @ Y_k + Y_i) + b.

    grid = (row blocks: parallel, k reduction: arbitrary/last).
    Y is VMEM-resident across the whole grid and sliced in-kernel with pl.ds;
    the f32 output block is resident across k and used as the accumulator.
    """
    i = pl.program_id(0)
    k = pl.program_id(1)
    tm = out_ref.shape[0]
    tk = a_ref.shape[1]

    @pl.when(k == 0)
    def _():
        out_ref[...] = jnp.zeros_like(out_ref)

    y_k = y_ref[pl.ds(pl.multiple_of(k * tk, tk), tk), :]
    out_ref[...] += jnp.dot(a_ref[...], y_k, preferred_element_type=jnp.float32)

    @pl.when(k == pl.num_programs(1) - 1)
    def _():
        y_i = y_ref[pl.ds(pl.multiple_of(i * tm, tm), tm), :]
        # dropout: eval-mode identity.
        # TODO(synk): training-mode dropout acts on the aggregated h, so it
        #   would need an aggregate-first ordering + pltpu.prng_seed/bernoulli.
        out_ref[...] = (d_ref[...] * (out_ref[...] + y_i.astype(jnp.float32))
                        + b_ref[...])


def gcn_layer_low(graph, feature, weight, bias):
    """GCNLayer forward, freq='low'. `weight` is nn.Linear weight [out, in]."""
    a_p, d_p = graph["a_p"], graph["d_p"]
    n, n_pad, tm, tk = graph["n"], graph["n_pad"], graph["tm"], graph["tk"]
    in_feats = feature.shape[1]
    out_feats = weight.shape[0]
    fin_pad = _round_up(in_feats, LANE)
    fout_pad = _round_up(out_feats, LANE)

    # Lane-dense zero-padded per-call operands (O(N·Fin) / O(Fin·Fout): cheap).
    f_p = jnp.zeros((n_pad, fin_pad), jnp.bfloat16).at[:n, :in_feats].set(
        feature.astype(jnp.bfloat16))
    w_p = jnp.zeros((fin_pad, fout_pad), jnp.bfloat16).at[:in_feats, :out_feats].set(
        weight.T.astype(jnp.bfloat16))
    b_p = jnp.zeros((1, fout_pad), jnp.float32).at[0, :out_feats].set(
        bias.astype(jnp.float32))

    # Pass 1: Y = (d ⊙ X) @ W^T  (project first — typical GCNs have Fout << Fin).
    # TODO(synk): when out_feats >> in_feats an aggregate-first order would use
    #   a narrower streaming accumulator; not implemented here.
    y_p = pl.pallas_call(
        _project_kernel,
        out_shape=jax.ShapeDtypeStruct((n_pad, fout_pad), jnp.bfloat16),
        grid=(n_pad // tm,),
        in_specs=[
            pl.BlockSpec((tm, 1), lambda i: (i, 0)),                 # d rows
            pl.BlockSpec((tm, fin_pad), lambda i: (i, 0)),           # X rows
            pl.BlockSpec((fin_pad, fout_pad), lambda i: (0, 0)),     # W (resident)
        ],
        out_specs=pl.BlockSpec((tm, fout_pad), lambda i: (i, 0)),
        compiler_params=pltpu.CompilerParams(
            dimension_semantics=("parallel",)),
    )(d_p, f_p, w_p)

    # Pass 2: out = d ⊙ (A @ Y + Y) + b — stream bf16 A tiles through the MXU,
    # accumulate in f32 directly in the resident output block.
    grid = (n_pad // tm, n_pad // tk)       # (rows: parallel, reduction: last)

    # VMEM budget: double-buffered d/A/out blocks + resident Y/bias (counted
    # with 2 buffers to be conservative), clamped under the physical VMEM of
    # the current generation with headroom.
    est = (2 * (tm * 4 + tm * tk * 2 + tm * fout_pad * 4)
           + 2 * (n_pad * fout_pad * 2 + fout_pad * 4))
    try:
        phys = int(pltpu.get_tpu_info().vmem_capacity_bytes)
    except Exception:
        phys = 64 * 1024 * 1024             # conservative fallback (v7x size)
    cap = int(phys * 3 // 4)                # ~48 MiB on v7x, ~96 MiB on v5e/v6e
    vmem_limit = int(min(max(2 * est, 32 * 1024 * 1024), cap))

    out_p = pl.pallas_call(
        _aggregate_kernel,
        out_shape=jax.ShapeDtypeStruct((n_pad, fout_pad), jnp.float32),
        grid=grid,
        in_specs=[
            pl.BlockSpec((tm, 1), lambda i, k: (i, 0)),              # d_i
            pl.BlockSpec((tm, tk), lambda i, k: (i, k)),             # A tile
            pl.BlockSpec((n_pad, fout_pad), lambda i, k: (0, 0)),    # Y (resident)
            pl.BlockSpec((1, fout_pad), lambda i, k: (0, 0)),        # b (resident)
        ],
        out_specs=pl.BlockSpec((tm, fout_pad), lambda i, k: (i, 0)),
        compiler_params=pltpu.CompilerParams(
            dimension_semantics=("parallel", "arbitrary"),
            vmem_limit_bytes=vmem_limit),
    )(d_p, a_p, y_p, b_p)

    return out_p[:n, :out_feats]


def _xavier_uniform(key, shape, gain):
    fan_out, fan_in = shape  # nn.Linear weight is [out, in]
    bound = gain * math.sqrt(6.0 / (fan_in + fan_out))
    return jax.random.uniform(key, shape, jnp.float32, minval=-bound, maxval=bound)


if __name__ == "__main__":
    # Non-multiple-of-128 N exercises the padding / tile-clamping path.
    N, IN_FEATS, OUT_FEATS = 200, 8, 32
    key = jax.random.PRNGKey(0)
    k_a, k_f, k_w, k_b = jax.random.split(key, 4)

    # synthetic symmetric 0/1 adjacency (no self loops; kernel folds in +I)
    a_rand = jax.random.uniform(k_a, (N, N))
    adjacency = (a_rand + a_rand.T > 1.0).astype(jnp.float32)
    adjacency = adjacency * (1.0 - jnp.eye(N, dtype=jnp.float32))

    # g.ndata['hat_d'] ~ D^{-1/2} of (A + I)
    deg_hat = adjacency.sum(axis=1) + 1.0
    hat_d = 1.0 / jnp.sqrt(deg_hat)

    feature = jax.random.normal(k_f, (N, IN_FEATS), jnp.float32)

    # nn.Linear params: xavier_uniform_(weight, gain=1.414), default bias init
    weight = _xavier_uniform(k_w, (OUT_FEATS, IN_FEATS), gain=1.414)
    b_bound = 1.0 / math.sqrt(IN_FEATS)
    bias = jax.random.uniform(k_b, (OUT_FEATS,), jnp.float32,
                              minval=-b_bound, maxval=b_bound)

    graph = prepare_gcn_graph(hat_d, adjacency)   # one-time per static graph
    out = gcn_layer_low(graph, feature, weight, bias)
    out = jax.block_until_ready(out)

    # pure-JAX f32 reference; kernel uses bf16 MXU operands + f32 accumulation,
    # so compare at a bf16-appropriate tolerance.
    D_ = jnp.diag(hat_d)
    A_hat = adjacency + jnp.eye(N, dtype=jnp.float32)
    ref = (D_ @ A_hat @ D_ @ feature) @ weight.T + bias

    assert out.shape == (N, OUT_FEATS)
    max_err = jnp.max(jnp.abs(out - ref))
    assert jnp.allclose(out, ref, atol=3e-2, rtol=3e-2), (
        f"mismatch vs reference (max abs err {max_err})")

    print("KERNEL_OK")
</pallas_src>

<mosaic_0001>
module attributes {stable_mosaic.version = 11 : i64} {
  func.func @_project_kernel(%arg0: i32, %arg1: memref<128x1xf32, #tpu.memory_space<vmem>>, %arg2: memref<128x128xbf16, #tpu.memory_space<vmem>>, %arg3: memref<128x128xbf16, #tpu.memory_space<vmem>>, %arg4: memref<128x128xbf16, #tpu.memory_space<vmem>>) attributes {dimension_semantics = [#tpu.dimension_semantics<parallel>], iteration_bounds = array<i64: 2>, scalar_prefetch = 0 : i64, scratch_operands = 0 : i64, tpu.core_type = #tpu.core_type<tc>, window_params = [{transform_indices = @transform_0, window_bounds = array<i64: 128, 1>}, {transform_indices = @transform_1, window_bounds = array<i64: 128, 128>}, {pipeline_mode = #tpu.pipeline_mode<synchronous>, transform_indices = @transform_2, window_bounds = array<i64: 128, 128>}, {transform_indices = @transform_3, window_bounds = array<i64: 128, 128>}]} {
    %c0 = arith.constant 0 : index
    %c0_0 = arith.constant 0 : index
    %0 = vector.load %arg1[%c0, %c0_0] : memref<128x1xf32, #tpu.memory_space<vmem>>, vector<128x1xf32>
    %c0_1 = arith.constant 0 : index
    %c0_2 = arith.constant 0 : index
    %1 = vector.load %arg2[%c0_1, %c0_2] : memref<128x128xbf16, #tpu.memory_space<vmem>>, vector<128x128xbf16>
    %2 = arith.extf %1 : vector<128x128xbf16> to vector<128x128xf32>
    %3 = vector.broadcast %0 : vector<128x1xf32> to vector<128x128xf32>
    %4 = arith.mulf %3, %2 : vector<128x128xf32>
    %5 = arith.truncf %4 : vector<128x128xf32> to vector<128x128xbf16>
    %c0_3 = arith.constant 0 : index
    %c0_4 = arith.constant 0 : index
    %6 = vector.load %arg3[%c0_3, %c0_4] : memref<128x128xbf16, #tpu.memory_space<vmem>>, vector<128x128xbf16>
    %cst = arith.constant dense<0.000000e+00> : vector<128x128xf32>
    %7 = tpu.matmul %5, %6, %cst {dimension_numbers = #tpu.dot_dimension_numbers<[1], [0], [0], [1], [0, 0, 1, 1], [], []>} : vector<128x128xbf16>, vector<128x128xbf16>, vector<128x128xf32> -> vector<128x128xf32>
    %8 = arith.truncf %7 : vector<128x128xf32> to vector<128x128xbf16>
    %c0_5 = arith.constant 0 : index
    %c0_6 = arith.constant 0 : index
    %9 = vector.load %arg4[%c0_5, %c0_6] : memref<128x128xbf16, #tpu.memory_space<vmem>>, vector<128x128xbf16>
    tpu.vector_store %arg4[%c0_5, %c0_6], %8 {strides = array<i32>} : memref<128x128xbf16, #tpu.memory_space<vmem>>, vector<128x128xbf16>,
    return
  }
  func.func @transform_0(%arg0: i32) -> (i32, i32) {
    %c0_i32 = arith.constant 0 : i32
    %c0_i32_0 = arith.constant 0 : i32
    return %arg0, %c0_i32 : i32, i32
  }
  func.func @transform_1(%arg0: i32) -> (i32, i32) {
    %c0_i32 = arith.constant 0 : i32
    %c0_i32_0 = arith.constant 0 : i32
    return %arg0, %c0_i32 : i32, i32
  }
  func.func @transform_2(%arg0: i32) -> (i32, i32) {
    %c0_i32 = arith.constant 0 : i32
    %c0_i32_0 = arith.constant 0 : i32
    %c0_i32_1 = arith.constant 0 : i32
    return %c0_i32, %c0_i32_0 : i32, i32
  }
  func.func @transform_3(%arg0: i32) -> (i32, i32) {
    %c0_i32 = arith.constant 0 : i32
    %c0_i32_0 = arith.constant 0 : i32
    return %arg0, %c0_i32 : i32, i32
  }
}

</mosaic_0001>

<llo_original>
// kernel: tpu_custom_call.1
$region0: #{tpu_custom_call.1}
  #allocation0 [shape = 'u32[]', space=smem, size = 0x4, offset = 0x4, fixed_abs, tag = 'smem constant byte address 0x4 - core index']
  #allocation1 [shape = 'u32[72,128]{1,0:T(1,128)}', space=vmem, size = 0x9000, scoped, tag = 'internal scratch']
  %s0 = inlined_call_operand.vmem [shape: f32[256,1], index: 0, kind: input, shape index: {}]
  %s1 = inlined_call_operand.vmem [shape: bf16[256,128], index: 1, kind: input, shape index: {}]
  %s2 = inlined_call_operand.vmem [shape: bf16[128,128], index: 2, kind: input, shape index: {}]
  %s3 = inlined_call_operand.hbm [shape: bf16[256,128], index: 3, kind: output, shape index: {}]
  %s4 = sld [smem:[#allocation0]]
  $region45: #{tpu_custom_call.1} parent=0
    _
  %s6 = ssub.s32 1, %s4
  %s7 = scalar_select 0, %s6, %s4
  $region1: #{tpu_custom_call.1} parent=0
    #allocation2 [shape = 'u8[65536]{0}', space=vmem, size = 0x10000, scoped, tag = 'output window, operand 0']
    #allocation3 [shape = 's32[2]{0}', space=sflag, size = 0x8, scoped, tag = 'scoped memory for tpu_custom_call.1']
    %8 = vsyncpa [#allocation3], 0
    %s9 = scalar_lea.sflag [#allocation3], 1
    %10 = vsyncpa %s9, 0
    loop: start=0, step=1, limit=4
    $region2: #{tpu_custom_call.1} parent=1 // loop_pre_header
      _
    $region3: #{tpu_custom_call.1} parent=1 // loop_header
      %s12 = sphi 0, %s16
      %p13 = scmp.ge.s32.totalorder %s12, 4
      %s22 = sphi 0, %s24
      %s25 = sphi 0, %s22
      %s26 = sphi 0, %s25
      %s42 = sphi 0, %s26
      %s48 = sphi 0, %s50
      %s51 = sphi 0, %s48
      %s52 = sphi 0, %s51
      %s68 = sphi 0, %s52
      %s72 = sphi 0, %s72
      %s74 = sphi 0, %s72
      %s75 = sphi 0, %s74
      %s89 = sphi 0, %s75
      %s95 = sphi 0, %s97
      %s98 = sphi 0, %s95
      %s99 = sphi 0, %s98
      %s115 = sphi 0, %s99
    $region4: #{tpu_custom_call.1} parent=1 // loop_header_branch
      %15 = sbr.rel (%p13) target = $region8
    $region5: #{tpu_custom_call.1} parent=1 // loop_body
      %s17 = ssub.s32 %s12, 1
      %s18 = ssub.s32 %s12, 2
      %s19 = sadd.s32 %s12, 1
      %s20 = ssub.s32 %s12, %s19
      %p21 = scmp.eq.s32.totalorder %s20, 0
      %s23 = sadd.s32 %s22, 1
      %s24 = scalar_select %p21, %s22, %s23
      %p27 = pneg %p21
      %p28 = scmp.eq.s32.totalorder %s12, 1
      %p29 = por %p27, %p28
      %p30 = scmp.ne.s32.totalorder %s22, %s25
      %p31 = scmp.eq.s32.totalorder %s12, 0
      %p32 = por %p30, %p31
      %p33 = scmp.ne.s32.totalorder %s22, %s25
      %p34 = scmp.eq.s32.totalorder %s17, 1
      %p35 = por %p33, %p34
      %p36 = scmp.ne.s32.totalorder %s25, %s26
      %p37 = scmp.eq.s32.totalorder %s17, 0
      %p38 = por %p36, %p37
      %p39 = scmp.ne.s32.totalorder %s25, %s26
      %p40 = scmp.eq.s32.totalorder %s18, 1
      %p41 = por %p39, %p40
      %p43 = scmp.ne.s32.totalorder %s26, %s42
      %p44 = scmp.eq.s32.totalorder %s18, 0
      %p45 = por %p43, %p44
      %s46 = ssub.s32 %s12, %s19
      %p47 = scmp.eq.s32.totalorder %s46, 0
      %s49 = sadd.s32 %s48, 1
      %s50 = scalar_select %p47, %s48, %s49
      %p53 = pneg %p47
      %p54 = scmp.eq.s32.totalorder %s12, 1
      %p55 = por %p53, %p54
      %p56 = scmp.ne.s32.totalorder %s48, %s51
      %p57 = scmp.eq.s32.totalorder %s12, 0
      %p58 = por %p56, %p57
      %p59 = scmp.ne.s32.totalorder %s48, %s51
      %p60 = scmp.eq.s32.totalorder %s17, 1
      %p61 = por %p59, %p60
      %p62 = scmp.ne.s32.totalorder %s51, %s52
      %p63 = scmp.eq.s32.totalorder %s17, 0
      %p64 = por %p62, %p63
      %p65 = scmp.ne.s32.totalorder %s51, %s52
      %p66 = scmp.eq.s32.totalorder %s18, 1
      %p67 = por %p65, %p66
      %p69 = scmp.ne.s32.totalorder %s52, %s68
      %p70 = scmp.eq.s32.totalorder %s18, 0
      %p71 = por %p69, %p70
      %s73 = sadd.s32 %s72, 1
      %p76 = scmp.eq.s32.totalorder %s12, 1
      %p77 = scmp.ne.s32.totalorder %s72, %s74
      %p78 = scmp.eq.s32.totalorder %s12, 0
      %p79 = por %p77, %p78
      %p80 = scmp.ne.s32.totalorder %s72, %s74
      %p81 = scmp.eq.s32.totalorder %s17, 1
      %p82 = por %p80, %p81
      %p83 = scmp.ne.s32.totalorder %s74, %s75
      %p84 = scmp.eq.s32.totalorder %s17, 0
      %p85 = por %p83, %p84
      %p86 = scmp.ne.s32.totalorder %s74, %s75
      %p87 = scmp.eq.s32.totalorder %s18, 1
      %p88 = por %p86, %p87
      %p90 = scmp.ne.s32.totalorder %s75, %s89
      %p91 = scmp.eq.s32.totalorder %s18, 0
      %p92 = por %p90, %p91
      %s93 = ssub.s32 %s12, %s19
      %p94 = scmp.eq.s32.totalorder %s93, 0
      %s96 = sadd.s32 %s95, 1
      %s97 = scalar_select %p94, %s95, %s96
      %p100 = pneg %p94
      %p101 = scmp.eq.s32.totalorder %s12, 1
      %p102 = por %p100, %p101
      %p103 = scmp.ne.s32.totalorder %s95, %s98
      %p104 = scmp.eq.s32.totalorder %s12, 0
      %p105 = por %p103, %p104
      %p106 = scmp.ne.s32.totalorder %s95, %s98
      %p107 = scmp.eq.s32.totalorder %s17, 1
      %p108 = por %p106, %p107
      %p109 = scmp.ne.s32.totalorder %s98, %s99
      %p110 = scmp.eq.s32.totalorder %s17, 0
      %p111 = por %p109, %p110
      %p112 = scmp.ne.s32.totalorder %s98, %s99
      %p113 = scmp.eq.s32.totalorder %s18, 1
      %p114 = por %p112, %p113
      %p116 = scmp.ne.s32.totalorder %s99, %s115
      %p117 = scmp.eq.s32.totalorder %s18, 0
      %p118 = por %p116, %p117
      %p119 = scmp.le.s32.totalorder 1, %s12
      %p120 = scmp.lt.s32.totalorder %s12, 3
      %p121 = pnand %p119, %p120
      %p122 = pneg %p121
      // Predicated region
      $region9: #{tpu_custom_call.1} parent=5 // pred_check
        _
      $region10: #{tpu_custom_call.1} parent=5 // pred_check_branch
        %124 = sbr.rel (%p121) target = $region12
      $region11: #{tpu_custom_call.1} parent=5 // pred_region
        %s125 = ssub.s32 %s12, 1
        // Predicated region
        $region13: #{tpu_custom_call.1} parent=11 // pred_check
          %p126 = pneg %p85
        $region14: #{tpu_custom_call.1} parent=11 // pred_check_branch
          %128 = sbr.rel (%p126) target = $region16
        $region15: #{tpu_custom_call.1} parent=11 // pred_region
          _
        $region16: #{tpu_custom_call.1} parent=11 // pred_fallthru
          _
      $region12: #{tpu_custom_call.1} parent=5 // pred_fallthru
        _
      %p129 = scmp.lt.s32.totalorder %s12, 2
      // Predicated region
      $region17: #{tpu_custom_call.1} parent=5 // pred_check
        %p130 = pneg %p129
      $region18: #{tpu_custom_call.1} parent=5 // pred_check_branch
        %132 = sbr.rel (%p130) target = $region20
      $region19: #{tpu_custom_call.1} parent=5 // pred_region
        // Predicated region
        $region21: #{tpu_custom_call.1} parent=19 // pred_check
          %p133 = pneg %p32
        $region22: #{tpu_custom_call.1} parent=19 // pred_check_branch
          %135 = sbr.rel (%p133) target = $region24
        $region23: #{tpu_custom_call.1} parent=19 // pred_region
          %s136 = smul.u32 16, %s12
          %p137 = scmp.lt.s32.totalorder %s136, 31
          %s138 = scalar_select %p137, %s136, 31
          %s139 = smul.addr %s138, 8
          %s140 = scalar_lea.vmem %s0, %s139
          %s141 = smul.u32 16, %s12
        $region24: #{tpu_custom_call.1} parent=19 // pred_fallthru
          _
        // Predicated region
        $region25: #{tpu_custom_call.1} parent=19 // pred_check
          %p142 = pneg %p58
        $region26: #{tpu_custom_call.1} parent=19 // pred_check_branch
          %144 = sbr.rel (%p142) target = $region28
        $region27: #{tpu_custom_call.1} parent=19 // pred_region
          %s145 = smul.u32 16, %s12
          %p146 = scmp.lt.s32.totalorder %s145, 31
          %s147 = scalar_select %p146, %s145, 31
          %s148 = smul.addr %s147, 4
          %s149 = scalar_lea.vmem %s1, %s148
          %s150 = smul.u32 16, %s12
        $region28: #{tpu_custom_call.1} parent=19 // pred_fallthru
          _
      $region20: #{tpu_custom_call.1} parent=5 // pred_fallthru
        _
      %p151 = scmp.le.s32.totalorder 1, %s12
      %p152 = scmp.lt.s32.totalorder %s12, 3
      %p153 = pnand %p151, %p152
      %p154 = pneg %p153
      // Predicated region
      $region29: #{tpu_custom_call.1} parent=5 // pred_check
        _
      $region30: #{tpu_custom_call.1} parent=5 // pred_check_branch
        %156 = sbr.rel (%p153) target = $region32
      $region31: #{tpu_custom_call.1} parent=5 // pred_region
        %s157 = ssub.s32 %s12, 1
        %s158 = smul.u32 16, %s17
        %p159 = scmp.lt.s32.totalorder %s158, 31
        %s160 = scalar_select %p159, %s158, 31
        %s161 = smul.addr %s160, 8
        %s162 = scalar_lea.vmem %s0, %s161
        %p163 = pneg %p38
        %p164 = pneg %p35
        %s165 = smul.u32 16, %s17
        %p166 = scmp.lt.s32.totalorder %s165, 31
        %s167 = scalar_select %p166, %s165, 31
        %s168 = smul.addr %s167, 4
        %s169 = scalar_lea.vmem %s1, %s168
        %p170 = pneg %p64
        %p171 = pneg %p61
        %p172 = pneg %p85
        %p173 = pneg %p82
        %p174 = pneg %p111
        %p175 = pneg %p108
        %s176 = sand.u32 %s98, 1
        %s177 = scalar_lea.sflag [#allocation3], %s176
        %s178 = sand.u32 %s98, 1
        %s179 = smul.addr %s178, 64
        %s180 = scalar_lea.vmem [#allocation2], %s179
        %s181 = smul.u32 16, %s17
        %p182 = scmp.lt.s32.totalorder %s181, 31
        %s183 = scalar_select %p182, %s181, 31
        %s184 = smul.addr %s183, 8
        %s185 = scalar_lea.vmem %s0, %s184
        %s186 = smul.u32 16, %s17
        %s187 = smul.u32 16, %s17
        %p188 = scmp.lt.s32.totalorder %s187, 31
        %s189 = scalar_select %p188, %s187, 31
        %s190 = smul.addr %s189, 4
        %s191 = scalar_lea.vmem %s1, %s190
        %s192 = smul.u32 16, %s17
        %s193 = smul.u32 16, %s17
        %v194 = vld [vmem:[%s185] sm:$0xff]
        %v195 = vld [vmem:[%s185 + $0x8] sm:$0xff]
        %v196 = vld [vmem:[%s185 + $0x10] sm:$0xff]
        %v197 = vld [vmem:[%s185 + $0x18] sm:$0xff]
        %v198 = vld [vmem:[%s185 + $0x20] sm:$0xff]
        %v199 = vld [vmem:[%s185 + $0x28] sm:$0xff]
        %v200 = vld [vmem:[%s185 + $0x30] sm:$0xff]
        %v201 = vld [vmem:[%s185 + $0x38] sm:$0xff]
        %v202 = vld [vmem:[%s185 + $0x40] sm:$0xff]
        %v203 = vld [vmem:[%s185 + $0x48] sm:$0xff]
        %v204 = vld [vmem:[%s185 + $0x50] sm:$0xff]
        %v205 = vld [vmem:[%s185 + $0x58] sm:$0xff]
        %v206 = vld [vmem:[%s185 + $0x60] sm:$0xff]
        %v207 = vld [vmem:[%s185 + $0x68] sm:$0xff]
        %v208 = vld [vmem:[%s185 + $0x70] sm:$0xff]
        %v209 = vld [vmem:[%s185 + $0x78] sm:$0xff]
        %v210 = vld [vmem:[%s191] sm:$0xf]
        %v211 = vld [vmem:[%s191 + $0x4] sm:$0xf]
        %v212 = vld [vmem:[%s191 + $0x8] sm:$0xf]
        %v213 = vld [vmem:[%s191 + $0xc] sm:$0xf]
        %v214 = vld [vmem:[%s191 + $0x10] sm:$0xf]
        %v215 = vld [vmem:[%s191 + $0x14] sm:$0xf]
        %v216 = vld [vmem:[%s191 + $0x18] sm:$0xf]
        %v217 = vld [vmem:[%s191 + $0x1c] sm:$0xf]
        %v218 = vld [vmem:[%s191 + $0x20] sm:$0xf]
        %v219 = vld [vmem:[%s191 + $0x24] sm:$0xf]
        %v220 = vld [vmem:[%s191 + $0x28] sm:$0xf]
        %v221 = vld [vmem:[%s191 + $0x2c] sm:$0xf]
        %v222 = vld [vmem:[%s191 + $0x30] sm:$0xf]
        %v223 = vld [vmem:[%s191 + $0x34] sm:$0xf]
        %v224 = vld [vmem:[%s191 + $0x38] sm:$0xf]
        %v225 = vld [vmem:[%s191 + $0x3c] sm:$0xf]
        %v226 = vunpack.c.l.bf16 %v210
        %v227 = vunpack.c.l.bf16 %v211
        %v228 = vunpack.c.l.bf16 %v212
        %v229 = vunpack.c.l.bf16 %v213
        %v230 = vunpack.c.l.bf16 %v214
        %v231 = vunpack.c.l.bf16 %v215
        %v232 = vunpack.c.l.bf16 %v216
        %v233 = vunpack.c.l.bf16 %v217
        %v234 = vunpack.c.l.bf16 %v218
        %v235 = vunpack.c.l.bf16 %v219
        %v236 = vunpack.c.l.bf16 %v220
        %v237 = vunpack.c.l.bf16 %v221
        %v238 = vunpack.c.l.bf16 %v222
        %v239 = vunpack.c.l.bf16 %v223
        %v240 = vunpack.c.l.bf16 %v224
        %v241 = vunpack.c.l.bf16 %v225
        %243 = vset.pattern.permute.xlu0 0
        %244 = vperm.xlu0 %243, %v194
        %v245 = vpop.permute.xlu0 %244
        %248 = vset.pattern.permute.xlu0 0
        %249 = vperm.xlu0 %248, %v195
        %v250 = vpop.permute.xlu0 %249
        %253 = vset.pattern.permute.xlu0 0
        %254 = vperm.xlu0 %253, %v196
        %v255 = vpop.permute.xlu0 %254
        %258 = vset.pattern.permute.xlu0 0
        %259 = vperm.xlu0 %258, %v197
        %v260 = vpop.permute.xlu0 %259
        %263 = vset.pattern.permute.xlu0 0
        %264 = vperm.xlu0 %263, %v198
        %v265 = vpop.permute.xlu0 %264
        %268 = vset.pattern.permute.xlu0 0
        %269 = vperm.xlu0 %268, %v199
        %v270 = vpop.permute.xlu0 %269
        %273 = vset.pattern.permute.xlu0 0
        %274 = vperm.xlu0 %273, %v200
        %v275 = vpop.permute.xlu0 %274
        %278 = vset.pattern.permute.xlu0 0
        %279 = vperm.xlu0 %278, %v201
        %v280 = vpop.permute.xlu0 %279
        %283 = vset.pattern.permute.xlu0 0
        %284 = vperm.xlu0 %283, %v202
        %v285 = vpop.permute.xlu0 %284
        %288 = vset.pattern.permute.xlu0 0
        %289 = vperm.xlu0 %288, %v203
        %v290 = vpop.permute.xlu0 %289
        %293 = vset.pattern.permute.xlu0 0
        %294 = vperm.xlu0 %293, %v204
        %v295 = vpop.permute.xlu0 %294
        %298 = vset.pattern.permute.xlu0 0
        %299 = vperm.xlu0 %298, %v205
        %v300 = vpop.permute.xlu0 %299
        %303 = vset.pattern.permute.xlu0 0
        %304 = vperm.xlu0 %303, %v206
        %v305 = vpop.permute.xlu0 %304
        %308 = vset.pattern.permute.xlu0 0
        %309 = vperm.xlu0 %308, %v207
        %v310 = vpop.permute.xlu0 %309
        %313 = vset.pattern.permute.xlu0 0
        %314 = vperm.xlu0 %313, %v208
        %v315 = vpop.permute.xlu0 %314
        %318 = vset.pattern.permute.xlu0 0
        %319 = vperm.xlu0 %318, %v209
        %v320 = vpop.permute.xlu0 %319
        %v322 = vmul.f32 %v245, %v226
        %v323 = vmul.f32 %v250, %v227
        %v324 = vmul.f32 %v255, %v228
        %v325 = vmul.f32 %v260, %v229
        %v326 = vmul.f32 %v265, %v230
        %v327 = vmul.f32 %v270, %v231
        %v328 = vmul.f32 %v275, %v232
        %v329 = vmul.f32 %v280, %v233
        %v330 = vmul.f32 %v285, %v234
        %v331 = vmul.f32 %v290, %v235
        %v332 = vmul.f32 %v295, %v236
        %v333 = vmul.f32 %v300, %v237
        %v334 = vmul.f32 %v305, %v238
        %v335 = vmul.f32 %v310, %v239
        %v336 = vmul.f32 %v315, %v240
        %v337 = vmul.f32 %v320, %v241
        %v338 = vpack.c.bf16 %v323, %v322
        %v339 = vpack.c.bf16 %v325, %v324
        %v340 = vpack.c.bf16 %v327, %v326
        %v341 = vpack.c.bf16 %v329, %v328
        %v342 = vpack.c.bf16 %v331, %v330
        %v343 = vpack.c.bf16 %v333, %v332
        %v344 = vpack.c.bf16 %v335, %v334
        %v345 = vpack.c.bf16 %v337, %v336
        %v346 = vld [vmem:[%s2] sm:$0xf]
        %v347 = vld [vmem:[%s2 + $0x4] sm:$0xf]
        %v348 = vld [vmem:[%s2 + $0x8] sm:$0xf]
        %v349 = vld [vmem:[%s2 + $0xc] sm:$0xf]
        %v350 = vld [vmem:[%s2 + $0x10] sm:$0xf]
        %v351 = vld [vmem:[%s2 + $0x14] sm:$0xf]
        %v352 = vld [vmem:[%s2 + $0x18] sm:$0xf]
        %v353 = vld [vmem:[%s2 + $0x1c] sm:$0xf]
        %v354 = vld [vmem:[%s2 + $0x20] sm:$0xf]
        %v355 = vld [vmem:[%s2 + $0x24] sm:$0xf]
        %v356 = vld [vmem:[%s2 + $0x28] sm:$0xf]
        %v357 = vld [vmem:[%s2 + $0x2c] sm:$0xf]
        %v358 = vld [vmem:[%s2 + $0x30] sm:$0xf]
        %v359 = vld [vmem:[%s2 + $0x34] sm:$0xf]
        %v360 = vld [vmem:[%s2 + $0x38] sm:$0xf]
        %v361 = vld [vmem:[%s2 + $0x3c] sm:$0xf]
        %v378 = vunpack.c.l.b16 %v346
        %v379 = vunpack.c.l.b16 %v347
        %v380 = vunpack.c.l.b16 %v348
        %v381 = vunpack.c.l.b16 %v349
        %v382 = vunpack.c.l.b16 %v350
        %v383 = vunpack.c.l.b16 %v351
        %v384 = vunpack.c.l.b16 %v352
        %v385 = vunpack.c.l.b16 %v353
        %v386 = vunpack.c.l.b16 %v354
        %v387 = vunpack.c.l.b16 %v355
        %v388 = vunpack.c.l.b16 %v356
        %v389 = vunpack.c.l.b16 %v357
        %v390 = vunpack.c.l.b16 %v358
        %v391 = vunpack.c.l.b16 %v359
        %v392 = vunpack.c.l.b16 %v360
        %v393 = vunpack.c.l.b16 %v361
        %v394 = vpack.c.b16 %v379, %v378
        %v395 = vpack.c.b16 %v381, %v380
        %v396 = vpack.c.b16 %v383, %v382
        %v397 = vpack.c.b16 %v385, %v384
        %v398 = vpack.c.b16 %v387, %v386
        %v399 = vpack.c.b16 %v389, %v388
        %v400 = vpack.c.b16 %v391, %v390
        %v401 = vpack.c.b16 %v393, %v392
        %410 = vmatpush.bf16.msra.mxu0 %v401
        %411 = vmatpush.bf16.msra.mxu0 %v400
        %412 = vmatpush.bf16.msra.mxu0 %v399
        %413 = vmatpush.bf16.msra.mxu0 %v398
        %414 = vmatpush.bf16.msra.mxu0 %v397
        %415 = vmatpush.bf16.msra.mxu0 %v396
        %416 = vmatpush.bf16.msra.mxu0 %v395
        %417 = vmatpush.bf16.msra.mxu0 %v394
        %418 = vmatmul.bf16.gmra.mxu0 %v338
        %v419 = vpop.f32.mrf.mxu0
        %v420 = vadd.f32 0.0, %v419
        %v421 = vpop.f32.mrf.mxu0
        %v422 = vadd.f32 0.0, %v421
        %423 = vmatmul.bf16.gmra.mxu0 %v339
        %v424 = vpop.f32.mrf.mxu0
        %v425 = vadd.f32 0.0, %v424
        %v426 = vpop.f32.mrf.mxu0
        %v427 = vadd.f32 0.0, %v426
        %428 = vmatmul.bf16.gmra.mxu0 %v340
        %v429 = vpop.f32.mrf.mxu0
        %v430 = vadd.f32 0.0, %v429
        %v431 = vpop.f32.mrf.mxu0
        %v432 = vadd.f32 0.0, %v431
        %433 = vmatmul.bf16.gmra.mxu0 %v341
        %v434 = vpop.f32.mrf.mxu0
        %v435 = vadd.f32 0.0, %v434
        %v436 = vpop.f32.mrf.mxu0
        %v437 = vadd.f32 0.0, %v436
        %438 = vmatmul.bf16.gmra.mxu0 %v342
        %v439 = vpop.f32.mrf.mxu0
        %v440 = vadd.f32 0.0, %v439
        %v441 = vpop.f32.mrf.mxu0
        %v442 = vadd.f32 0.0, %v441
        %443 = vmatmul.bf16.gmra.mxu0 %v343
        %v444 = vpop.f32.mrf.mxu0
        %v445 = vadd.f32 0.0, %v444
        %v446 = vpop.f32.mrf.mxu0
        %v447 = vadd.f32 0.0, %v446
        %448 = vmatmul.bf16.gmra.mxu0 %v344
        %v449 = vpop.f32.mrf.mxu0
        %v450 = vadd.f32 0.0, %v449
        %v451 = vpop.f32.mrf.mxu0
        %v452 = vadd.f32 0.0, %v451
        %453 = vmatmul.bf16.gmra.mxu0 %v345
        %v454 = vpop.f32.mrf.mxu0
        %v455 = vadd.f32 0.0, %v454
        %v456 = vpop.f32.mrf.mxu0
        %v457 = vadd.f32 0.0, %v456
        %458 = vdwg.mxu0
        %v459 = vpack.c.bf16 %v420, %v420
        %v460 = vpack.c.bf16 %v422, %v422
        %v461 = vpack.c.bf16 %v425, %v425
        %v462 = vpack.c.bf16 %v427, %v427
        %v463 = vpack.c.bf16 %v430, %v430
        %v464 = vpack.c.bf16 %v432, %v432
        %v465 = vpack.c.bf16 %v435, %v435
        %v466 = vpack.c.bf16 %v437, %v437
        %v467 = vpack.c.bf16 %v440, %v440
        %v468 = vpack.c.bf16 %v442, %v442
        %v469 = vpack.c.bf16 %v445, %v445
        %v470 = vpack.c.bf16 %v447, %v447
        %v471 = vpack.c.bf16 %v450, %v450
        %v472 = vpack.c.bf16 %v452, %v452
        %v473 = vpack.c.bf16 %v455, %v455
        %v474 = vpack.c.bf16 %v457, %v457
        %475 = vst [vmem:[%s180] sm:$0xf] %v459
        %476 = vst [vmem:[%s180 + $0x4] sm:$0xf] %v460
        %477 = vst [vmem:[%s180 + $0x8] sm:$0xf] %v461
        %478 = vst [vmem:[%s180 + $0xc] sm:$0xf] %v462
        %479 = vst [vmem:[%s180 + $0x10] sm:$0xf] %v463
        %480 = vst [vmem:[%s180 + $0x14] sm:$0xf] %v464
        %481 = vst [vmem:[%s180 + $0x18] sm:$0xf] %v465
        %482 = vst [vmem:[%s180 + $0x1c] sm:$0xf] %v466
        %483 = vst [vmem:[%s180 + $0x20] sm:$0xf] %v467
        %484 = vst [vmem:[%s180 + $0x24] sm:$0xf] %v468
        %485 = vst [vmem:[%s180 + $0x28] sm:$0xf] %v469
        %486 = vst [vmem:[%s180 + $0x2c] sm:$0xf] %v470
        %487 = vst [vmem:[%s180 + $0x30] sm:$0xf] %v471
        %488 = vst [vmem:[%s180 + $0x34] sm:$0xf] %v472
        %489 = vst [vmem:[%s180 + $0x38] sm:$0xf] %v473
        %490 = vst [vmem:[%s180 + $0x3c] sm:$0xf] %v474
        %s491 = sand.u32 %s98, 1
        %s492 = scalar_lea.sflag [#allocation3], %s491
        %s493 = sand.u32 %s98, 1
        %s494 = smul.addr %s493, 64
        %s495 = scalar_lea.vmem [#allocation2], %s494
        // Predicated region
        $region33: #{tpu_custom_call.1} parent=31 // pred_check
          %p496 = pneg %p108
        $region34: #{tpu_custom_call.1} parent=31 // pred_check_branch
          %498 = sbr.rel (%p496) target = $region36
        $region35: #{tpu_custom_call.1} parent=31 // pred_region
          %s499 = smul.u32 16, %s17
          %501 = vsyncadd %s492, 0
          %s502 = smul.addr %s499, 4
          %s503 = scalar_lea.hbm %s3, %s502
          %s504 = sshll.u32 %s495, 4
          %s505 = int_to_ptr.vmem [resolvable:$true] %s504
          %s506 = sshll.u32 %s503, 4
          %s507 = int_to_ptr.hbm [resolvable:$true] %s506
          %512 = dma.vmem_to_hbm [thread:$0]  %s505, 1024, %s507, %s492, 64, 64, 4
        $region36: #{tpu_custom_call.1} parent=31 // pred_fallthru
          _
      $region32: #{tpu_custom_call.1} parent=5 // pred_fallthru
        _
      %p513 = scmp.le.s32.totalorder 2, %s12
      // Predicated region
      $region37: #{tpu_custom_call.1} parent=5 // pred_check
        %p514 = pneg %p513
      $region38: #{tpu_custom_call.1} parent=5 // pred_check_branch
        %516 = sbr.rel (%p514) target = $region40
      $region39: #{tpu_custom_call.1} parent=5 // pred_region
        %s517 = ssub.s32 %s12, 2
        // Predicated region
        $region41: #{tpu_custom_call.1} parent=39 // pred_check
          %p518 = pneg %p114
        $region42: #{tpu_custom_call.1} parent=39 // pred_check_branch
          %520 = sbr.rel (%p518) target = $region44
        $region43: #{tpu_custom_call.1} parent=39 // pred_region
          %s521 = sand.u32 %s99, 1
          %s522 = scalar_lea.sflag [#allocation3], %s521
          %s523 = sand.u32 %s99, 1
          %s524 = smul.addr %s523, 64
          %s525 = scalar_lea.vmem [#allocation2], %s524
          %527 = dma.done %s522, 1024
        $region44: #{tpu_custom_call.1} parent=39 // pred_fallthru
          _
      $region40: #{tpu_custom_call.1} parent=5 // pred_fallthru
        _
    $region6: #{tpu_custom_call.1} parent=1 // loop_footer
      %s16 = sadd.s32 1, %s12
    $region7: #{tpu_custom_call.1} parent=1 // loop_footer_branch
      %11 = sbr.rel target = $region3
    $region8: #{tpu_custom_call.1} parent=1 // loop_exit
      _
    %528 = vsyncpa [#allocation3], 1
    %s529 = scalar_lea.sflag [#allocation3], 1
    %530 = vsyncpa %s529, 1

</llo_original>
